<compile_context>
chip_gen: v5e
topology: v5e:2x2
jax: 0.10.0
libtpu: 0.0.40
codegen_flags: <defaults>
</compile_context>

<pallas_src>
import functools
import math

import jax
import jax.numpy as jnp
from jax import lax
from jax.experimental import pallas as pl
from jax.experimental.pallas import tpu as pltpu

EPS = 1e-08
INF = 100000000.0
_LOG_EPS = math.log(EPS)


def _round_up(x, m):
    return (x + m - 1) // m * m


def _ce_kl_pwce_kernel(logits_ref, cent_ref, lab_ref, res_ref,
                       s_acc, l_acc, hist_acc, ce_acc, kl_acc, *, n, c):
    i = pl.program_id(0)
    last = pl.num_programs(0) - 1

    @pl.when(i == 0)
    def _init():
        s_acc[...] = jnp.zeros_like(s_acc)
        l_acc[...] = jnp.zeros_like(l_acc)
        hist_acc[...] = jnp.zeros_like(hist_acc)
        ce_acc[...] = jnp.zeros_like(ce_acc)
        kl_acc[...] = jnp.zeros_like(kl_acc)

    x = logits_ref[...].astype(jnp.float32)        # (T, C) logits tile
    cent = cent_ref[...].astype(jnp.float32)       # (T, C) centroids tile
    lab = lab_ref[...]                             # (T, 1) int32; -1 marks padded rows

    # Row-wise stable softmax / log_softmax.  One reciprocal per row (EUP), then a
    # broadcast multiply, instead of a (T,C) vector divide on the VALU.
    m = jnp.max(x, axis=1, keepdims=True)
    z = x - m
    ez = jnp.exp(z)
    denom = jnp.sum(ez, axis=1, keepdims=True)
    logsm = z - jnp.log(denom)                     # log_softmax
    sm = ez * pl.reciprocal(denom)                 # softmax

    validf = (lab >= 0).astype(jnp.float32)        # (T, 1) mask for padded rows
    iota_c = lax.broadcasted_iota(jnp.int32, x.shape, 1)
    onehot = (iota_c == lab).astype(jnp.float32)   # (T, C); all-zero for padded rows

    # (1) CrossEntropy per-class column partial sums: sum_i onehot[i,c]*logsm[i,c].
    #     (Sublane reduce only; the lane reduce + scalar move is deferred to finalize.)
    ce_acc[...] += jnp.sum(onehot * logsm, axis=0, keepdims=True)

    # (2) KL(batchmean, log_target) column partial sums: sm * (logsm - log(clip(cent))).
    log_cent = jnp.log(jnp.clip(cent, EPS, 1.0))
    kl_acc[...] += jnp.sum(validf * sm * (logsm - log_cent), axis=0, keepdims=True)

    # (3) Pairwise-CE sufficient statistics.  log_out = log(clip(softmax, EPS, INF)),
    #     but softmax <= 1, so it is just logsm clamped below at log(EPS) — no 2nd log.
    log_out = jnp.maximum(logsm, _LOG_EPS)
    s_acc[...] += lax.dot_general(onehot, sm,                 # (C, C): per-class sums
                                  dimension_numbers=(((0,), (0,)), ((), ())),
                                  preferred_element_type=jnp.float32)
    l_acc[...] += lax.dot_general(onehot, log_out,            # (C, C)
                                  dimension_numbers=(((0,), (0,)), ((), ())),
                                  preferred_element_type=jnp.float32)
    hist_acc[...] += jnp.sum(onehot, axis=0, keepdims=True)   # per-class counts

    @pl.when(i == last)
    def _finalize():
        s = s_acc[...]                             # (C, C)
        l = l_acc[...]                             # (C, C)
        hist = hist_acc[...]                       # (1, C)
        # Column sums of S / L recover sum_i sm_i[c] / sum_j log_out_j[c] over valid rows.
        col_sm = jnp.sum(s, axis=0, keepdims=True)
        col_log = jnp.sum(l, axis=0, keepdims=True)
        sum_all = -jnp.sum(col_sm * col_log)       # sum over ALL (i,j) of CE[i,j]
        sum_same = -jnp.sum(s * l)                 # sum over same-label pairs
        cnt_neg = n * n - jnp.sum(hist * hist)     # number of different-label pairs
        pwce = (sum_all - sum_same) / cnt_neg      # NaN if no negative pair (matches ref)
        res_ref[0] = -jnp.sum(ce_acc[...]) / n     # CrossEntropyLoss (mean)
        res_ref[1] = jnp.sum(kl_acc[...]) / n      # KL-div, batchmean, log_target
        res_ref[2] = -pwce                         # -pair_wise_CE


def ce_kl_pwce_loss(output, target, centroids, *, tile_n=256):
    """Returns a length-3 float32 vector: [ce_loss, kl_loss, -pairwise_ce]."""
    n, c = output.shape

    # Row-tile size: multiple of 8, capped so ~a dozen live f32 copies of one tile stay
    # comfortably inside a 32 MiB scoped-VMEM budget (safe on v7x's 64 MiB VMEM too).
    rows_budget = max(8, ((2 * 1024 * 1024) // (4 * c)) // 8 * 8)
    tile = max(8, min(tile_n, rows_budget, _round_up(n, 8)) // 8 * 8)
    n_pad = _round_up(n, tile)

    lab = target.astype(jnp.int32)
    pad = n_pad - n
    if pad:
        output = jnp.pad(output, ((0, pad), (0, 0)))
        centroids = jnp.pad(centroids, ((0, pad), (0, 0)), constant_values=1.0)
        lab = jnp.pad(lab, (0, pad), constant_values=-1)   # -1 flags padded rows
    lab = lab.reshape(n_pad, 1)

    kernel = functools.partial(_ce_kl_pwce_kernel, n=n, c=c)
    return pl.pallas_call(
        kernel,
        out_shape=jax.ShapeDtypeStruct((3,), jnp.float32),
        grid=(n_pad // tile,),
        in_specs=[
            pl.BlockSpec((tile, c), lambda i: (i, 0)),      # logits
            pl.BlockSpec((tile, c), lambda i: (i, 0)),      # centroids
            pl.BlockSpec((tile, 1), lambda i: (i, 0)),      # labels
        ],
        out_specs=pl.BlockSpec(memory_space=pltpu.MemorySpace.SMEM),
        scratch_shapes=[
            pltpu.VMEM((c, c), jnp.float32),                # S accumulator
            pltpu.VMEM((c, c), jnp.float32),                # L accumulator
            pltpu.VMEM((1, c), jnp.float32),                # label histogram
            pltpu.VMEM((1, c), jnp.float32),                # CE column partial sums
            pltpu.VMEM((1, c), jnp.float32),                # KL column partial sums
        ],
        compiler_params=pltpu.CompilerParams(
            dimension_semantics=("arbitrary",),             # reduction over row tiles
            vmem_limit_bytes=32 * 1024 * 1024,
        ),
    )(output, centroids, lab)


def _reference(output, target, centroids):
    """Pure-JAX reference mirroring the PyTorch module."""
    n, c = output.shape
    out32 = output.astype(jnp.float32)
    logsm = jax.nn.log_softmax(out32, axis=1)
    sm = jax.nn.softmax(out32, axis=1)
    ce = -jnp.mean(logsm[jnp.arange(n), target])
    log_cent = jnp.log(jnp.clip(centroids.astype(jnp.float32), EPS, 1.0))
    kl = jnp.sum(sm * (logsm - log_cent)) / n
    log_out = jnp.log(jnp.clip(sm, EPS, INF))
    ce_mat = -sm @ log_out.T
    mask_neg = (target[:, None] != target[None, :]).astype(jnp.float32)
    pwce = jnp.sum(mask_neg * ce_mat) / jnp.sum(mask_neg)
    return jnp.stack([ce, kl, -pwce]).astype(jnp.float32)


if __name__ == "__main__":
    key = jax.random.PRNGKey(0)

    # Test 1: batch=8, classes=32 (single grid step).
    N, C = 8, 32
    k1, k2 = jax.random.split(key)
    output = jax.random.normal(k1, (N, C), dtype=jnp.float32)
    centroids = jax.random.uniform(k2, (N, C), dtype=jnp.float32,
                                   minval=0.01, maxval=1.0)
    target = jnp.array([0, 1, 2, 3, 0, 1, 2, 3], dtype=jnp.int32)
    res = jax.block_until_ready(ce_kl_pwce_loss(output, target, centroids))
    ref = _reference(output, target, centroids)
    assert jnp.allclose(res, ref, rtol=1e-4, atol=1e-5), (res, ref)

    # Test 2: ragged batch=20 with tile_n=8 (exercises padding mask + multi-step
    # grid accumulation).
    N2, C2 = 20, 32
    k3, k4 = jax.random.split(k1)
    output2 = jax.random.normal(k3, (N2, C2), dtype=jnp.float32)
    centroids2 = jax.random.uniform(k4, (N2, C2), dtype=jnp.float32,
                                    minval=0.01, maxval=1.0)
    target2 = (jnp.arange(N2) % 5).astype(jnp.int32)
    res2 = jax.block_until_ready(ce_kl_pwce_loss(output2, target2, centroids2,
                                                 tile_n=8))
    ref2 = _reference(output2, target2, centroids2)
    assert jnp.allclose(res2, ref2, rtol=1e-4, atol=1e-5), (res2, ref2)

    print("KERNEL_OK")
</pallas_src>

<mosaic_0001>
module attributes {stable_mosaic.version = 11 : i64} {
  func.func @_ce_kl_pwce_kernel(%arg0: i32, %arg1: memref<8x32xf32, #tpu.memory_space<vmem>>, %arg2: memref<8x32xf32, #tpu.memory_space<vmem>>, %arg3: memref<8x1xi32, #tpu.memory_space<vmem>>, %arg4: memref<3xf32, #tpu.memory_space<smem>>, %arg5: memref<32x32xf32, #tpu.memory_space<vmem>>, %arg6: memref<32x32xf32, #tpu.memory_space<vmem>>, %arg7: memref<1x32xf32, #tpu.memory_space<vmem>>, %arg8: memref<1x32xf32, #tpu.memory_space<vmem>>, %arg9: memref<1x32xf32, #tpu.memory_space<vmem>>) attributes {dimension_semantics = [#tpu.dimension_semantics<arbitrary>], iteration_bounds = array<i64: 1>, scalar_prefetch = 0 : i64, scratch_operands = 5 : i64, tpu.core_type = #tpu.core_type<tc>, window_params = [{transform_indices = @transform_0, window_bounds = array<i64: 8, 32>}, {transform_indices = @transform_1, window_bounds = array<i64: 8, 32>}, {transform_indices = @transform_2, window_bounds = array<i64: 8, 1>}, {transform_indices = @transform_3, window_bounds = array<i64: 3>}]} {
    %c0_i32 = arith.constant 0 : i32
    %0 = arith.cmpi eq, %arg0, %c0_i32 : i32
    %1 = arith.extui %0 : i1 to i32
    %c0_i32_0 = arith.constant 0 : i32
    %2 = arith.cmpi ne, %1, %c0_i32_0 : i32
    scf.if %2 {
      %cst_38 = arith.constant 0.000000e+00 : f32
      %66 = vector.broadcast %cst_38 : f32 to vector<32x32xf32>
      %c0_39 = arith.constant 0 : index
      %c0_40 = arith.constant 0 : index
      %67 = vector.load %arg5[%c0_39, %c0_40] : memref<32x32xf32, #tpu.memory_space<vmem>>, vector<32x32xf32>
      tpu.vector_store %arg5[%c0_39, %c0_40], %66 {strides = array<i32>} : memref<32x32xf32, #tpu.memory_space<vmem>>, vector<32x32xf32>,
      %cst_41 = arith.constant 0.000000e+00 : f32
      %68 = vector.broadcast %cst_41 : f32 to vector<32x32xf32>
      %c0_42 = arith.constant 0 : index
      %c0_43 = arith.constant 0 : index
      %69 = vector.load %arg6[%c0_42, %c0_43] : memref<32x32xf32, #tpu.memory_space<vmem>>, vector<32x32xf32>
      tpu.vector_store %arg6[%c0_42, %c0_43], %68 {strides = array<i32>} : memref<32x32xf32, #tpu.memory_space<vmem>>, vector<32x32xf32>,
      %cst_44 = arith.constant 0.000000e+00 : f32
      %70 = vector.broadcast %cst_44 : f32 to vector<1x32xf32>
      %c0_45 = arith.constant 0 : index
      %c0_46 = arith.constant 0 : index
      %71 = vector.load %arg7[%c0_45, %c0_46] : memref<1x32xf32, #tpu.memory_space<vmem>>, vector<1x32xf32>
      tpu.vector_store %arg7[%c0_45, %c0_46], %70 {strides = array<i32>} : memref<1x32xf32, #tpu.memory_space<vmem>>, vector<1x32xf32>,
      %cst_47 = arith.constant 0.000000e+00 : f32
      %72 = vector.broadcast %cst_47 : f32 to vector<1x32xf32>
      %c0_48 = arith.constant 0 : index
      %c0_49 = arith.constant 0 : index
      %73 = vector.load %arg8[%c0_48, %c0_49] : memref<1x32xf32, #tpu.memory_space<vmem>>, vector<1x32xf32>
      tpu.vector_store %arg8[%c0_48, %c0_49], %72 {strides = array<i32>} : memref<1x32xf32, #tpu.memory_space<vmem>>, vector<1x32xf32>,
      %cst_50 = arith.constant 0.000000e+00 : f32
      %74 = vector.broadcast %cst_50 : f32 to vector<1x32xf32>
      %c0_51 = arith.constant 0 : index
      %c0_52 = arith.constant 0 : index
      %75 = vector.load %arg9[%c0_51, %c0_52] : memref<1x32xf32, #tpu.memory_space<vmem>>, vector<1x32xf32>
      tpu.vector_store %arg9[%c0_51, %c0_52], %74 {strides = array<i32>} : memref<1x32xf32, #tpu.memory_space<vmem>>, vector<1x32xf32>,
    } else {
    }
    %c0 = arith.constant 0 : index
    %c0_1 = arith.constant 0 : index
    %3 = vector.load %arg1[%c0, %c0_1] : memref<8x32xf32, #tpu.memory_space<vmem>>, vector<8x32xf32>
    %c0_2 = arith.constant 0 : index
    %c0_3 = arith.constant 0 : index
    %4 = vector.load %arg2[%c0_2, %c0_3] : memref<8x32xf32, #tpu.memory_space<vmem>>, vector<8x32xf32>
    %c0_4 = arith.constant 0 : index
    %c0_5 = arith.constant 0 : index
    %5 = vector.load %arg3[%c0_4, %c0_5] : memref<8x1xi32, #tpu.memory_space<vmem>>, vector<8x1xi32>
    %cst = arith.constant dense<0xFF800000> : vector<8xf32>
    %6 = vector.multi_reduction <maximumf>, %3, %cst [1] : vector<8x32xf32> to vector<8xf32>
    %7 = vector.shape_cast %6 : vector<8xf32> to vector<8x1xf32>
    %8 = vector.broadcast %7 : vector<8x1xf32> to vector<8x32xf32>
    %9 = arith.subf %3, %8 : vector<8x32xf32>
    %10 = math.exp %9 : vector<8x32xf32>
    %cst_6 = arith.constant dense<0.000000e+00> : vector<8xf32>
    %11 = vector.multi_reduction <add>, %10, %cst_6 [1] : vector<8x32xf32> to vector<8xf32>
    %12 = vector.shape_cast %11 : vector<8xf32> to vector<8x1xf32>
    %13 = math.log %12 : vector<8x1xf32>
    %14 = vector.broadcast %13 : vector<8x1xf32> to vector<8x32xf32>
    %15 = arith.subf %9, %14 : vector<8x32xf32>
    %16 = tpu.reciprocal %12 : vector<8x1xf32> -> vector<8x1xf32>
    %17 = vector.broadcast %16 : vector<8x1xf32> to vector<8x32xf32>
    %18 = arith.mulf %10, %17 : vector<8x32xf32>
    %c0_i32_7 = arith.constant 0 : i32
    %19 = vector.broadcast %c0_i32_7 : i32 to vector<8x1xi32>
    %20 = arith.cmpi sge, %5, %19 : vector<8x1xi32>
    %21 = arith.extui %20 : vector<8x1xi1> to vector<8x1xi32>
    %22 = arith.sitofp %21 : vector<8x1xi32> to vector<8x1xf32>
    %23 = tpu.iota {dimensions = array<i32: 1>} : vector<8x32xi32>
    %24 = vector.broadcast %5 : vector<8x1xi32> to vector<8x32xi32>
    %25 = arith.cmpi eq, %23, %24 : vector<8x32xi32>
    %26 = arith.extui %25 : vector<8x32xi1> to vector<8x32xi32>
    %27 = arith.sitofp %26 : vector<8x32xi32> to vector<8x32xf32>
    %c0_8 = arith.constant 0 : index
    %c0_9 = arith.constant 0 : index
    %28 = vector.load %arg8[%c0_8, %c0_9] : memref<1x32xf32, #tpu.memory_space<vmem>>, vector<1x32xf32>
    %29 = arith.mulf %27, %15 : vector<8x32xf32>
    %cst_10 = arith.constant dense<0.000000e+00> : vector<32xf32>
    %30 = vector.multi_reduction <add>, %29, %cst_10 [0] : vector<8x32xf32> to vector<32xf32>
    %31 = vector.shape_cast %30 : vector<32xf32> to vector<1x32xf32>
    %32 = arith.addf %28, %31 : vector<1x32xf32>
    %c0_11 = arith.constant 0 : index
    %c0_12 = arith.constant 0 : index
    %33 = vector.load %arg8[%c0_11, %c0_12] : memref<1x32xf32, #tpu.memory_space<vmem>>, vector<1x32xf32>
    tpu.vector_store %arg8[%c0_11, %c0_12], %32 {strides = array<i32>} : memref<1x32xf32, #tpu.memory_space<vmem>>, vector<1x32xf32>,
    %cst_13 = arith.constant 9.99999993E-9 : f32
    %cst_14 = arith.constant 1.000000e+00 : f32
    %34 = vector.broadcast %cst_13 : f32 to vector<8x32xf32>
    %35 = arith.maximumf %34, %4 : vector<8x32xf32>
    %36 = vector.broadcast %cst_14 : f32 to vector<8x32xf32>
    %37 = arith.minimumf %36, %35 : vector<8x32xf32>
    %38 = math.log %37 : vector<8x32xf32>
    %c0_15 = arith.constant 0 : index
    %c0_16 = arith.constant 0 : index
    %39 = vector.load %arg9[%c0_15, %c0_16] : memref<1x32xf32, #tpu.memory_space<vmem>>, vector<1x32xf32>
    %40 = vector.broadcast %22 : vector<8x1xf32> to vector<8x32xf32>
    %41 = arith.mulf %40, %18 : vector<8x32xf32>
    %42 = arith.subf %15, %38 : vector<8x32xf32>
    %43 = arith.mulf %41, %42 : vector<8x32xf32>
    %cst_17 = arith.constant dense<0.000000e+00> : vector<32xf32>
    %44 = vector.multi_reduction <add>, %43, %cst_17 [0] : vector<8x32xf32> to vector<32xf32>
    %45 = vector.shape_cast %44 : vector<32xf32> to vector<1x32xf32>
    %46 = arith.addf %39, %45 : vector<1x32xf32>
    %c0_18 = arith.constant 0 : index
    %c0_19 = arith.constant 0 : index
    %47 = vector.load %arg9[%c0_18, %c0_19] : memref<1x32xf32, #tpu.memory_space<vmem>>, vector<1x32xf32>
    tpu.vector_store %arg9[%c0_18, %c0_19], %46 {strides = array<i32>} : memref<1x32xf32, #tpu.memory_space<vmem>>, vector<1x32xf32>,
    %cst_20 = arith.constant -18.420681 : f32
    %48 = vector.broadcast %cst_20 : f32 to vector<8x32xf32>
    %49 = arith.maximumf %15, %48 : vector<8x32xf32>
    %c0_21 = arith.constant 0 : index
    %c0_22 = arith.constant 0 : index
    %50 = vector.load %arg5[%c0_21, %c0_22] : memref<32x32xf32, #tpu.memory_space<vmem>>, vector<32x32xf32>
    %cst_23 = arith.constant dense<0.000000e+00> : vector<32x32xf32>
    %51 = tpu.matmul %27, %18, %cst_23 {dimension_numbers = #tpu.dot_dimension_numbers<[0], [0], [1], [1], [0, 1, 1, 1], [], []>} : vector<8x32xf32>, vector<8x32xf32>, vector<32x32xf32> -> vector<32x32xf32>
    %52 = arith.addf %50, %51 : vector<32x32xf32>
    %c0_24 = arith.constant 0 : index
    %c0_25 = arith.constant 0 : index
    %53 = vector.load %arg5[%c0_24, %c0_25] : memref<32x32xf32, #tpu.memory_space<vmem>>, vector<32x32xf32>
    tpu.vector_store %arg5[%c0_24, %c0_25], %52 {strides = array<i32>} : memref<32x32xf32, #tpu.memory_space<vmem>>, vector<32x32xf32>,
    %c0_26 = arith.constant 0 : index
    %c0_27 = arith.constant 0 : index
    %54 = vector.load %arg6[%c0_26, %c0_27] : memref<32x32xf32, #tpu.memory_space<vmem>>, vector<32x32xf32>
    %cst_28 = arith.constant dense<0.000000e+00> : vector<32x32xf32>
    %55 = tpu.matmul %27, %49, %cst_28 {dimension_numbers = #tpu.dot_dimension_numbers<[0], [0], [1], [1], [0, 1, 1, 1], [], []>} : vector<8x32xf32>, vector<8x32xf32>, vector<32x32xf32> -> vector<32x32xf32>
    %56 = arith.addf %54, %55 : vector<32x32xf32>
    %c0_29 = arith.constant 0 : index
    %c0_30 = arith.constant 0 : index
    %57 = vector.load %arg6[%c0_29, %c0_30] : memref<32x32xf32, #tpu.memory_space<vmem>>, vector<32x32xf32>
    tpu.vector_store %arg6[%c0_29, %c0_30], %56 {strides = array<i32>} : memref<32x32xf32, #tpu.memory_space<vmem>>, vector<32x32xf32>,
    %c0_31 = arith.constant 0 : index
    %c0_32 = arith.constant 0 : index
    %58 = vector.load %arg7[%c0_31, %c0_32] : memref<1x32xf32, #tpu.memory_space<vmem>>, vector<1x32xf32>
    %cst_33 = arith.constant dense<0.000000e+00> : vector<32xf32>
    %59 = vector.multi_reduction <add>, %27, %cst_33 [0] : vector<8x32xf32> to vector<32xf32>
    %60 = vector.shape_cast %59 : vector<32xf32> to vector<1x32xf32>
    %61 = arith.addf %58, %60 : vector<1x32xf32>
    %c0_34 = arith.constant 0 : index
    %c0_35 = arith.constant 0 : index
    %62 = vector.load %arg7[%c0_34, %c0_35] : memref<1x32xf32, #tpu.memory_space<vmem>>, vector<1x32xf32>
    tpu.vector_store %arg7[%c0_34, %c0_35], %61 {strides = array<i32>} : memref<1x32xf32, #tpu.memory_space<vmem>>, vector<1x32xf32>,
    %c0_i32_36 = arith.constant 0 : i32
    %63 = arith.cmpi eq, %arg0, %c0_i32_36 : i32
    %64 = arith.extui %63 : i1 to i32
    %c0_i32_37 = arith.constant 0 : i32
    %65 = arith.cmpi ne, %64, %c0_i32_37 : i32
    scf.if %65 {
      %c0_38 = arith.constant 0 : index
      %c0_39 = arith.constant 0 : index
      %66 = vector.load %arg5[%c0_38, %c0_39] : memref<32x32xf32, #tpu.memory_space<vmem>>, vector<32x32xf32>
      %c0_40 = arith.constant 0 : index
      %c0_41 = arith.constant 0 : index
      %67 = vector.load %arg6[%c0_40, %c0_41] : memref<32x32xf32, #tpu.memory_space<vmem>>, vector<32x32xf32>
      %c0_42 = arith.constant 0 : index
      %c0_43 = arith.constant 0 : index
      %68 = vector.load %arg7[%c0_42, %c0_43] : memref<1x32xf32, #tpu.memory_space<vmem>>, vector<1x32xf32>
      %cst_44 = arith.constant dense<0.000000e+00> : vector<32xf32>
      %69 = vector.multi_reduction <add>, %66, %cst_44 [0] : vector<32x32xf32> to vector<32xf32>
      %70 = vector.shape_cast %69 : vector<32xf32> to vector<1x32xf32>
      %cst_45 = arith.constant dense<0.000000e+00> : vector<32xf32>
      %71 = vector.multi_reduction <add>, %67, %cst_45 [0] : vector<32x32xf32> to vector<32xf32>
      %72 = vector.shape_cast %71 : vector<32xf32> to vector<1x32xf32>
      %73 = arith.mulf %70, %72 : vector<1x32xf32>
      %74 = vector.shape_cast %73 : vector<1x32xf32> to vector<1x1x32xf32>
      %cst_46 = arith.constant dense<0.000000e+00> : vector<1xf32>
      %75 = vector.multi_reduction <add>, %74, %cst_46 [1, 2] : vector<1x1x32xf32> to vector<1xf32>
      %76 = vector.shape_cast %75 : vector<1xf32> to vector<1x1x1xf32>
      %77 = vector.extract %76[0, 0, 0] : f32 from vector<1x1x1xf32>
      %cst_47 = arith.constant 0.000000e+00 : f32
      %78 = arith.subf %cst_47, %77 : f32
      %79 = arith.mulf %66, %67 : vector<32x32xf32>
      %80 = vector.shape_cast %79 : vector<32x32xf32> to vector<1x32x32xf32>
      %cst_48 = arith.constant dense<0.000000e+00> : vector<1xf32>
      %81 = vector.multi_reduction <add>, %80, %cst_48 [1, 2] : vector<1x32x32xf32> to vector<1xf32>
      %82 = vector.shape_cast %81 : vector<1xf32> to vector<1x1x1xf32>
      %83 = vector.extract %82[0, 0, 0] : f32 from vector<1x1x1xf32>
      %cst_49 = arith.constant 0.000000e+00 : f32
      %84 = arith.subf %cst_49, %83 : f32
      %85 = arith.mulf %68, %68 : vector<1x32xf32>
      %86 = vector.shape_cast %85 : vector<1x32xf32> to vector<1x1x32xf32>
      %cst_50 = arith.constant dense<0.000000e+00> : vector<1xf32>
      %87 = vector.multi_reduction <add>, %86, %cst_50 [1, 2] : vector<1x1x32xf32> to vector<1xf32>
      %88 = vector.shape_cast %87 : vector<1xf32> to vector<1x1x1xf32>
      %89 = vector.extract %88[0, 0, 0] : f32 from vector<1x1x1xf32>
      %cst_51 = arith.constant 6.400000e+01 : f32
      %90 = arith.subf %cst_51, %89 : f32
      %91 = arith.subf %78, %84 : f32
      %92 = arith.divf %91, %90 : f32
      %c0_52 = arith.constant 0 : index
      %c0_53 = arith.constant 0 : index
      %93 = vector.load %arg8[%c0_52, %c0_53] : memref<1x32xf32, #tpu.memory_space<vmem>>, vector<1x32xf32>
      %94 = vector.shape_cast %93 : vector<1x32xf32> to vector<1x1x32xf32>
      %cst_54 = arith.constant dense<0.000000e+00> : vector<1xf32>
      %95 = vector.multi_reduction <add>, %94, %cst_54 [1, 2] : vector<1x1x32xf32> to vector<1xf32>
      %96 = vector.shape_cast %95 : vector<1xf32> to vector<1x1x1xf32>
      %97 = vector.extract %96[0, 0, 0] : f32 from vector<1x1x1xf32>
      %cst_55 = arith.constant 0.000000e+00 : f32
      %98 = arith.subf %cst_55, %97 : f32
      %cst_56 = arith.constant 8.000000e+00 : f32
      %99 = arith.divf %98, %cst_56 : f32
      %c0_57 = arith.constant 0 : index
      %100 = memref.load %arg4[%c0_57] : memref<3xf32, #tpu.memory_space<smem>>
      memref.store %99, %arg4[%c0_57] : memref<3xf32, #tpu.memory_space<smem>>
      %c0_58 = arith.constant 0 : index
      %c0_59 = arith.constant 0 : index
      %101 = vector.load %arg9[%c0_58, %c0_59] : memref<1x32xf32, #tpu.memory_space<vmem>>, vector<1x32xf32>
      %102 = vector.shape_cast %101 : vector<1x32xf32> to vector<1x1x32xf32>
      %cst_60 = arith.constant dense<0.000000e+00> : vector<1xf32>
      %103 = vector.multi_reduction <add>, %102, %cst_60 [1, 2] : vector<1x1x32xf32> to vector<1xf32>
      %104 = vector.shape_cast %103 : vector<1xf32> to vector<1x1x1xf32>
      %105 = vector.extract %104[0, 0, 0] : f32 from vector<1x1x1xf32>
      %cst_61 = arith.constant 8.000000e+00 : f32
      %106 = arith.divf %105, %cst_61 : f32
      %c1 = arith.constant 1 : index
      %107 = memref.load %arg4[%c1] : memref<3xf32, #tpu.memory_space<smem>>
      memref.store %106, %arg4[%c1] : memref<3xf32, #tpu.memory_space<smem>>
      %cst_62 = arith.constant 0.000000e+00 : f32
      %108 = arith.subf %cst_62, %92 : f32
      %c2 = arith.constant 2 : index
      %109 = memref.load %arg4[%c2] : memref<3xf32, #tpu.memory_space<smem>>
      memref.store %108, %arg4[%c2] : memref<3xf32, #tpu.memory_space<smem>>
    } else {
    }
    return
  }
  func.func @transform_0(%arg0: i32) -> (i32, i32) {
    %c0_i32 = arith.constant 0 : i32
    %c0_i32_0 = arith.constant 0 : i32
    return %arg0, %c0_i32 : i32, i32
  }
  func.func @transform_1(%arg0: i32) -> (i32, i32) {
    %c0_i32 = arith.constant 0 : i32
    %c0_i32_0 = arith.constant 0 : i32
    return %arg0, %c0_i32 : i32, i32
  }
  func.func @transform_2(%arg0: i32) -> (i32, i32) {
    %c0_i32 = arith.constant 0 : i32
    %c0_i32_0 = arith.constant 0 : i32
    return %arg0, %c0_i32 : i32, i32
  }
  func.func @transform_3(%arg0: i32) -> i32 {
    %c0_i32 = arith.constant 0 : i32
    %c0_i32_0 = arith.constant 0 : i32
    return %c0_i32 : i32
  }
}

</mosaic_0001>

<llo_original>
// kernel: tpu_custom_call.1
$region0: #{tpu_custom_call.1}
  #allocation0 [shape = 'u32[]', space=smem, size = 0x4, offset = 0x4, fixed_abs, tag = 'smem constant byte address 0x4 - core index']
  #allocation1 [shape = 'u32[72,128]{1,0:T(1,128)}', space=vmem, size = 0x9000, scoped, tag = 'internal scratch']
  #allocation2 [shape = 'f32[32,32]{1,0:T(8,128)}', space=vmem, size = 0x4000, scoped, tag = 'scratch operand']
  #allocation3 [shape = 'f32[32,32]{1,0:T(8,128)}', space=vmem, size = 0x4000, scoped, tag = 'scratch operand']
  #allocation4 [shape = 'f32[1,32]{1,0:T(1,128)}', space=vmem, size = 0x200, scoped, tag = 'scratch operand']
  #allocation5 [shape = 'f32[1,32]{1,0:T(1,128)}', space=vmem, size = 0x200, scoped, tag = 'scratch operand']
  #allocation6 [shape = 'f32[1,32]{1,0:T(1,128)}', space=vmem, size = 0x200, scoped, tag = 'scratch operand']
  %s0 = inlined_call_operand.vmem [shape: f32[8,32], index: 0, kind: input, shape index: {}]
  %s1 = inlined_call_operand.hbm [shape: f32[8,32], index: 1, kind: input, shape index: {}]
  %s2 = inlined_call_operand.vmem [shape: s32[8,1], index: 2, kind: input, shape index: {}]
  %s3 = inlined_call_operand.hbm [shape: f32[3], index: 3, kind: output, shape index: {}]
  %s4 = sld [smem:[#allocation0]]
  $region34: #{tpu_custom_call.1} parent=0
    _
  %s6 = ssub.s32 1, %s4
  %s7 = scalar_select 0, %s6, %s4
  $region1: #{tpu_custom_call.1} parent=0
    #allocation7 [shape = 'u8[4096]{0}', space=vmem, size = 0x1000, scoped, tag = 'input window, operand 1, single buffered']
    #allocation8 [shape = 's32[1]{0}', space=sflag, size = 0x4, scoped, tag = 'scoped memory for tpu_custom_call.1']
    #allocation9 [shape = 's32[1]{0}', space=sflag, size = 0x4, scoped, tag = 'scoped memory for tpu_custom_call.1']
    #allocation10 [shape = 'u8[512]{0}', space=smem, size = 0x200, scoped, tag = 'output window, operand 0, single buffered']
    %8 = vsyncpa [#allocation8], 0
    %9 = vsyncpa [#allocation9], 0
    // Predicated region
    $region2: #{tpu_custom_call.1} parent=1 // pred_check
      _
    $region3: #{tpu_custom_call.1} parent=1 // pred_check_branch
      %11 = sbr.rel (0) target = $region5
    $region4: #{tpu_custom_call.1} parent=1 // pred_region
      _
    $region5: #{tpu_custom_call.1} parent=1 // pred_fallthru
      _
    // Predicated region
    $region6: #{tpu_custom_call.1} parent=1 // pred_check
      _
    $region7: #{tpu_custom_call.1} parent=1 // pred_check_branch
      %13 = sbr.rel (0) target = $region9
    $region8: #{tpu_custom_call.1} parent=1 // pred_region
      %15 = vsyncadd [#allocation8], 0
      %s17 = sshll.u32 %s1, 4
      %s18 = int_to_ptr.hbm [resolvable:$true] %s17
      %s19 = sshll.u32 [#allocation7], 4
      %s20 = int_to_ptr.vmem [resolvable:$true] %s19
      %22 = dma.hbm_to_vmem [thread:$0]  %s18, 128, %s20, [#allocation8]
    $region9: #{tpu_custom_call.1} parent=1 // pred_fallthru
      _
    // Predicated region
    $region10: #{tpu_custom_call.1} parent=1 // pred_check
      _
    $region11: #{tpu_custom_call.1} parent=1 // pred_check_branch
      %24 = sbr.rel (0) target = $region13
    $region12: #{tpu_custom_call.1} parent=1 // pred_region
      _
    $region13: #{tpu_custom_call.1} parent=1 // pred_fallthru
      _
    // Predicated region
    $region14: #{tpu_custom_call.1} parent=1 // pred_check
      _
    $region15: #{tpu_custom_call.1} parent=1 // pred_check_branch
      %26 = sbr.rel (0) target = $region17
    $region16: #{tpu_custom_call.1} parent=1 // pred_region
      %28 = dma.done [#allocation8], 128
    $region17: #{tpu_custom_call.1} parent=1 // pred_fallthru
      _
    %p29 = scmp.eq.s32.totalorder 0, 0
    // Predicated region
    $region18: #{tpu_custom_call.1} parent=1 // pred_check
      %p30 = pneg %p29
    $region19: #{tpu_custom_call.1} parent=1 // pred_check_branch
      %32 = sbr.rel (%p30) target = $region21
    $region20: #{tpu_custom_call.1} parent=1 // pred_region
      %vm33 = vcmask 261120
      %34 = vst.msk [vmem:[#allocation2] sm:$0xff] %vm33, 0.0
      %35 = vst.msk [vmem:[#allocation2 + $0x8] sm:$0xff] %vm33, 0.0
      %36 = vst.msk [vmem:[#allocation2 + $0x10] sm:$0xff] %vm33, 0.0
      %37 = vst.msk [vmem:[#allocation2 + $0x18] sm:$0xff] %vm33, 0.0
      %38 = vst.msk [vmem:[#allocation3] sm:$0xff] %vm33, 0.0
      %39 = vst.msk [vmem:[#allocation3 + $0x8] sm:$0xff] %vm33, 0.0
      %40 = vst.msk [vmem:[#allocation3 + $0x10] sm:$0xff] %vm33, 0.0
      %41 = vst.msk [vmem:[#allocation3 + $0x18] sm:$0xff] %vm33, 0.0
      %vm42 = vcmask 253952
      %43 = vst.msk [vmem:[#allocation4] sm:$0x1] %vm42, 0.0
      %44 = vst.msk [vmem:[#allocation5] sm:$0x1] %vm42, 0.0
      %45 = vst.msk [vmem:[#allocation6] sm:$0x1] %vm42, 0.0
    $region21: #{tpu_custom_call.1} parent=1 // pred_fallthru
      _
    %v46 = vld [vmem:[%s0] sm:$0xff]
    %v47 = vld [vmem:[#allocation7] sm:$0xff]
    %v48 = vld [vmem:[%s2] sm:$0xff]
    %vm49 = vcmask 261120
    %v50 = vsel %vm49, %v46, -inf
    %51 = vmax.xlane.f32.xlu0 %v50
    %v52 = vpop.xlane.xlu0 %51
    %v53 = vsub.f32 %v46, %v52
    %v54 = vmul.f32 %v53, 1.442695
    %v55 = vpow.pop %v54
    %v56 = vsel %vm49, %v55, 0.0
    %57 = vadd.xlane.f32.xlu0 %v56
    %v58 = vpop.xlane.xlu0 %57
    %v59 = vlog2.pop %v58
    %v60 = vmul.f32 %v59, 0.6931472
    %v61 = vsub.f32 %v53, %v60
    %v62 = vrcp.pop %v58
    %v63 = vmul.f32 %v58, %v62
    %v64 = vsub.f32 1.0, %v63
    %v65 = vmul.f32 %v62, %v64
    %v66 = vadd.f32 %v62, %v65
    %vm67 = vweird.f32 %v58
    %vm68 = vweird.f32 %v62
    %vm69 = vmor %vm67, %vm68
    %v70 = vsel %vm69, %v62, %v66
    %v71 = vand.u32 2147483647, %v58
    %vm72 = vcmp.eq.f32.partialorder %v71, 8.507059e+37
    %v73 = vand.u32 %v58, 2147483648
    %v74 = vor.u32 1.1754944e-38, %v73
    %v75 = vsel %vm72, %v74, %v70
    %v76 = vmul.f32 %v55, %v75
    %vm77 = vcmp.ge.s32.totalorder %v48, 0
    %v78 = vsel %vm77, 1, 0
    %v79 = vcvt.s32.f32 %v78
    %v80 = vlaneseq
    %v81 = vand.u32 %v80, 127
    %82 = vset.pattern.permute.xlu0 0
    %83 = vperm.xlu0 %82, %v48
    %v84 = vpop.permute.xlu0 %83
    %vm85 = vcmp.eq.s32.totalorder %v81, %v84
    %v86 = vsel %vm85, 1, 0
    %v87 = vcvt.s32.f32 %v86
    %v88 = vld [vmem:[#allocation5] sm:$0x1]
    %v89 = vmul.f32 %v87, %v61
    %v90 = vsel %vm49, %v89, 0.0
    %v91 = vrot.slane %v90, 4
    %v92 = vadd.f32 %v90, %v91
    %v93 = vrot.slane %v92, 2
    %v94 = vadd.f32 %v92, %v93
    %v95 = vrot.slane %v94, 1
    %v96 = vadd.f32 %v94, %v95
    %v97 = vadd.f32 %v88, %v96
    %vm98 = vcmask 253952
    %99 = vst.msk [vmem:[#allocation5] sm:$0x1] %vm98, %v97
    %v100 = vmax.f32 %v47, 1e-08
    %v101 = vmin.f32 %v100, 1.0
    %v102 = vlog2.pop %v101
    %v103 = vmul.f32 %v102, 0.6931472
    %v104 = vld [vmem:[#allocation6] sm:$0x1]
    %106 = vset.pattern.permute.xlu0 0
    %107 = vperm.xlu0 %106, %v79
    %v108 = vpop.permute.xlu0 %107
    %v110 = vmul.f32 %v108, %v76
    %v111 = vsub.f32 %v61, %v103
    %v112 = vmul.f32 %v110, %v111
    %v113 = vsel %vm49, %v112, 0.0
    %v114 = vrot.slane %v113, 4
    %v115 = vadd.f32 %v113, %v114
    %v116 = vrot.slane %v115, 2
    %v117 = vadd.f32 %v115, %v116
    %v118 = vrot.slane %v117, 1
    %v119 = vadd.f32 %v117, %v118
    %v120 = vadd.f32 %v104, %v119
    %121 = vst.msk [vmem:[#allocation6] sm:$0x1] %vm98, %v120
    %v122 = vmax.f32 %v61, -18.420681
    %v123 = vld [vmem:[#allocation2] sm:$0xff]
    %v124 = vld [vmem:[#allocation2 + $0x8] sm:$0xff]
    %v125 = vld [vmem:[#allocation2 + $0x10] sm:$0xff]
    %v126 = vld [vmem:[#allocation2 + $0x18] sm:$0xff]
    %127 = vxpose.xlu0.b32.start [1/16] %v87, 128
    %128 = vxpose.xlu0.b32.cont [2/16] 0.0, 128
    %129 = vxpose.xlu0.b32.cont [3/16] 0.0, 128
    %130 = vxpose.xlu0.b32.cont [4/16] 0.0, 128
    %131 = vxpose.xlu0.b32.cont [5/16] 0.0, 128
    %132 = vxpose.xlu0.b32.cont [6/16] 0.0, 128
    %133 = vxpose.xlu0.b32.cont [7/16] 0.0, 128
    %134 = vxpose.xlu0.b32.cont [8/16] 0.0, 128
    %135 = vxpose.xlu0.b32.cont [9/16] 0.0, 128
    %136 = vxpose.xlu0.b32.cont [10/16] 0.0, 128
    %137 = vxpose.xlu0.b32.cont [11/16] 0.0, 128
    %138 = vxpose.xlu0.b32.cont [12/16] 0.0, 128
    %139 = vxpose.xlu0.b32.cont [13/16] 0.0, 128
    %140 = vxpose.xlu0.b32.cont [14/16] 0.0, 128
    %141 = vxpose.xlu0.b32.cont [15/16] 0.0, 128
    %142 = vxpose.xlu0.b32.end [16/16] 0.0, 128
    %v143 = vpop.trf.xlu0
    %v144 = vpop.trf.xlu0
    %v145 = vpop.trf.xlu0
    %v146 = vpop.trf.xlu0
    %v147 = vpop.trf.xlu0
    %v148 = vpop.trf.xlu0
    %v149 = vpop.trf.xlu0
    %v150 = vpop.trf.xlu0
    %v151 = vpop.trf.xlu0
    %v152 = vpop.trf.xlu0
    %v153 = vpop.trf.xlu0
    %v154 = vpop.trf.xlu0
    %v155 = vpop.trf.xlu0
    %v156 = vpop.trf.xlu0
    %v157 = vpop.trf.xlu0
    %v158 = vpop.trf.xlu0
    %vm159 = vcmask 64512
    %v161 = vsel %vm159, %v143, 0
    %v164 = vsel %vm159, %v144, 0
    %v167 = vsel %vm159, %v145, 0
    %v170 = vsel %vm159, %v146, 0
    %172 = vmatpush.msra.mxu0 0.0
    %173 = vmatpush.msra.mxu0 0.0
    %174 = vmatpush.msra.mxu0 0.0
    %175 = vmatpush.msra.mxu0 0.0
    %176 = vmatpush.msra.mxu0 0.0
    %177 = vmatpush.msra.mxu0 0.0
    %178 = vmatpush.msra.mxu0 0.0
    %179 = vmatpush.msra.mxu0 0.0
    %180 = vmatpush.msra.mxu0 0.0
    %181 = vmatpush.msra.mxu0 0.0
    %182 = vmatpush.msra.mxu0 0.0
    %183 = vmatpush.msra.mxu0 0.0
    %184 = vmatpush.msra.mxu0 0.0
    %185 = vmatpush.msra.mxu0 0.0
    %186 = vmatpush.msra.mxu0 0.0
    %187 = vmatpush.msra.mxu0 %v76
    %188 = vmatmul.f32.gmra.mxu0 %v161
    %v189 = vpop.f32.mrf.mxu0
    %v190 = vadd.f32 0.0, %v189
    %191 = vmatmul.f32.gmra.mxu0 %v164
    %v192 = vpop.f32.mrf.mxu0
    %v193 = vadd.f32 0.0, %v192
    %194 = vmatmul.f32.gmra.mxu0 %v167
    %v195 = vpop.f32.mrf.mxu0
    %v196 = vadd.f32 0.0, %v195
    %197 = vmatmul.f32.gmra.mxu0 %v170
    %v198 = vpop.f32.mrf.mxu0
    %v199 = vadd.f32 0.0, %v198
    %200 = vdwg.mxu0
    %v201 = vadd.f32 %v123, %v190
    %v202 = vadd.f32 %v124, %v193
    %v203 = vadd.f32 %v125, %v196
    %v204 = vadd.f32 %v126, %v199
    %205 = vst.msk [vmem:[#allocation2] sm:$0xff] %vm49, %v201
    %206 = vst.msk [vmem:[#allocation2 + $0x8] sm:$0xff] %vm49, %v202
    %207 = vst.msk [vmem:[#allocation2 + $0x10] sm:$0xff] %vm49, %v203
    %208 = vst.msk [vmem:[#allocation2 + $0x18] sm:$0xff] %vm49, %v204
    %v209 = vld [vmem:[#allocation3] sm:$0xff]
    %v210 = vld [vmem:[#allocation3 + $0x8] sm:$0xff]
    %v211 = vld [vmem:[#allocation3 + $0x10] sm:$0xff]
    %v212 = vld [vmem:[#allocation3 + $0x18] sm:$0xff]
    %213 = vmatpush.msra.mxu0 0.0
    %214 = vmatpush.msra.mxu0 0.0
    %215 = vmatpush.msra.mxu0 0.0
    %216 = vmatpush.msra.mxu0 0.0
    %217 = vmatpush.msra.mxu0 0.0
    %218 = vmatpush.msra.mxu0 0.0
    %219 = vmatpush.msra.mxu0 0.0
    %220 = vmatpush.msra.mxu0 0.0
    %221 = vmatpush.msra.mxu0 0.0
    %222 = vmatpush.msra.mxu0 0.0
    %223 = vmatpush.msra.mxu0 0.0
    %224 = vmatpush.msra.mxu0 0.0
    %225 = vmatpush.msra.mxu0 0.0
    %226 = vmatpush.msra.mxu0 0.0
    %227 = vmatpush.msra.mxu0 0.0
    %228 = vmatpush.msra.mxu0 %v122
    %229 = vmatmul.f32.gmra.mxu0 %v161
    %v230 = vpop.f32.mrf.mxu0
    %v231 = vadd.f32 0.0, %v230
    %232 = vmatmul.f32.gmra.mxu0 %v164
    %v233 = vpop.f32.mrf.mxu0
    %v234 = vadd.f32 0.0, %v233
    %235 = vmatmul.f32.gmra.mxu0 %v167
    %v236 = vpop.f32.mrf.mxu0
    %v237 = vadd.f32 0.0, %v236
    %238 = vmatmul.f32.gmra.mxu0 %v170
    %v239 = vpop.f32.mrf.mxu0
    %v240 = vadd.f32 0.0, %v239
    %241 = vdwg.mxu0
    %v242 = vadd.f32 %v209, %v231
    %v243 = vadd.f32 %v210, %v234
    %v244 = vadd.f32 %v211, %v237
    %v245 = vadd.f32 %v212, %v240
    %246 = vst.msk [vmem:[#allocation3] sm:$0xff] %vm49, %v242
    %247 = vst.msk [vmem:[#allocation3 + $0x8] sm:$0xff] %vm49, %v243
    %248 = vst.msk [vmem:[#allocation3 + $0x10] sm:$0xff] %vm49, %v244
    %249 = vst.msk [vmem:[#allocation3 + $0x18] sm:$0xff] %vm49, %v245
    %v250 = vld [vmem:[#allocation4] sm:$0x1]
    %v251 = vsel %vm49, %v87, 0.0
    %v252 = vrot.slane %v251, 4
    %v253 = vadd.f32 %v251, %v252
    %v254 = vrot.slane %v253, 2
    %v255 = vadd.f32 %v253, %v254
    %v256 = vrot.slane %v255, 1
    %v257 = vadd.f32 %v255, %v256
    %v258 = vadd.f32 %v250, %v257
    %259 = vst.msk [vmem:[#allocation4] sm:$0x1] %vm98, %v258
    // Predicated region
    $region22: #{tpu_custom_call.1} parent=1 // pred_check
      %p260 = pneg %p29
    $region23: #{tpu_custom_call.1} parent=1 // pred_check_branch
      %262 = sbr.rel (%p260) target = $region25
    $region24: #{tpu_custom_call.1} parent=1 // pred_region
      %v263 = vld [vmem:[#allocation2] sm:$0xff]
      %v264 = vld [vmem:[#allocation2 + $0x8] sm:$0xff]
      %v265 = vld [vmem:[#allocation2 + $0x10] sm:$0xff]
      %v266 = vld [vmem:[#allocation2 + $0x18] sm:$0xff]
      %v267 = vld [vmem:[#allocation3] sm:$0xff]
      %v268 = vld [vmem:[#allocation3 + $0x8] sm:$0xff]
      %v269 = vld [vmem:[#allocation3 + $0x10] sm:$0xff]
      %v270 = vld [vmem:[#allocation3 + $0x18] sm:$0xff]
      %v271 = vld [vmem:[#allocation4] sm:$0x1]
      %v272 = vsel %vm49, %v263, 0.0
      %v273 = vsel %vm49, %v264, 0.0
      %v274 = vadd.f32 %v272, %v273
      %v275 = vsel %vm49, %v265, 0.0
      %v276 = vadd.f32 %v274, %v275
      %v277 = vsel %vm49, %v266, 0.0
      %v278 = vadd.f32 %v276, %v277
      %v279 = vrot.slane %v278, 4
      %v280 = vadd.f32 %v278, %v279
      %v281 = vrot.slane %v280, 2
      %v282 = vadd.f32 %v280, %v281
      %v283 = vrot.slane %v282, 1
      %v284 = vadd.f32 %v282, %v283
      %v285 = vsel %vm49, %v267, 0.0
      %v286 = vsel %vm49, %v268, 0.0
      %v287 = vadd.f32 %v285, %v286
      %v288 = vsel %vm49, %v269, 0.0
      %v289 = vadd.f32 %v287, %v288
      %v290 = vsel %vm49, %v270, 0.0
      %v291 = vadd.f32 %v289, %v290
      %v292 = vrot.slane %v291, 4
      %v293 = vadd.f32 %v291, %v292
      %v294 = vrot.slane %v293, 2
      %v295 = vadd.f32 %v293, %v294
      %v296 = vrot.slane %v295, 1
      %v297 = vadd.f32 %v295, %v296
      %v298 = vmul.f32 %v284, %v297
      %v299 = vsel %vm98, %v298, 0.0
      %300 = vadd.xlane.f32.xlu0 %v299
      %v301 = vpop.xlane.xlu0 %300
      %v302 = vrot.slane %v301, 4
      %v303 = vadd.f32 %v301, %v302
      %v304 = vrot.slane %v303, 2
      %v305 = vadd.f32 %v303, %v304
      %v306 = vrot.slane %v305, 1
      %v307 = vadd.f32 %v305, %v306
      %s308 = vtos %v307
      %s309 = ssub.f32 0.0, %s308
      %v310 = vmul.f32 %v263, %v267
      %v311 = vmul.f32 %v264, %v268
      %v312 = vmul.f32 %v265, %v269
      %v313 = vmul.f32 %v266, %v270
      %v314 = vsel %vm49, %v310, 0.0
      %v315 = vsel %vm49, %v311, 0.0
      %v316 = vadd.f32 %v314, %v315
      %v317 = vsel %vm49, %v312, 0.0
      %v318 = vadd.f32 %v316, %v317
      %v319 = vsel %vm49, %v313, 0.0
      %v320 = vadd.f32 %v318, %v319
      %321 = vadd.xlane.f32.xlu0 %v320
      %v322 = vpop.xlane.xlu0 %321
      %v323 = vrot.slane %v322, 4
      %v324 = vadd.f32 %v322, %v323
      %v325 = vrot.slane %v324, 2
      %v326 = vadd.f32 %v324, %v325
      %v327 = vrot.slane %v326, 1
      %v328 = vadd.f32 %v326, %v327
      %s329 = vtos %v328
      %s330 = ssub.f32 0.0, %s329
      %v331 = vmul.f32 %v271, %v271
      %v332 = vsel %vm98, %v331, 0.0
      %333 = vadd.xlane.f32.xlu0 %v332
      %v334 = vpop.xlane.xlu0 %333
      %v335 = vrot.slane %v334, 4
      %v336 = vadd.f32 %v334, %v335
      %v337 = vrot.slane %v336, 2
      %v338 = vadd.f32 %v336, %v337
      %v339 = vrot.slane %v338, 1
      %v340 = vadd.f32 %v338, %v339
      %s341 = vtos %v340
      %s342 = ssub.f32 64.0, %s341
      %s343 = ssub.f32 %s309, %s330
      %v344 = vstv %s342
      %v345 = vrcp.pop %v344
      %v346 = vmul.f32 %v344, %v345
      %v347 = vsub.f32 1.0, %v346
      %v348 = vmul.f32 %v345, %v347
      %v349 = vadd.f32 %v345, %v348
      %vm350 = vweird.f32 %v344
      %vm351 = vweird.f32 %v345
      %vm352 = vmor %vm350, %vm351
      %v353 = vsel %vm352, %v345, %v349
      %v354 = vand.u32 2147483647, %v344
      %vm355 = vcmp.eq.f32.partialorder %v354, 8.507059e+37
      %v356 = vand.u32 %v344, 2147483648
      %v357 = vor.u32 1.1754944e-38, %v356
      %v358 = vsel %vm355, %v357, %v353
      %s359 = vtos %v358
      %s360 = smul.f32 %s343, %s359
      %v361 = vld [vmem:[#allocation5] sm:$0x1]
      %v362 = vsel %vm98, %v361, 0.0
      %363 = vadd.xlane.f32.xlu0 %v362
      %v364 = vpop.xlane.xlu0 %363
      %v365 = vrot.slane %v364, 4
      %v366 = vadd.f32 %v364, %v365
      %v367 = vrot.slane %v366, 2
      %v368 = vadd.f32 %v366, %v367
      %v369 = vrot.slane %v368, 1
      %v370 = vadd.f32 %v368, %v369
      %s371 = vtos %v370
      %s372 = ssub.f32 0.0, %s371
      %v373 = vrcp.pop 8.0
      %v374 = vmul.f32 8.0, %v373
      %v375 = vsub.f32 1.0, %v374
      %v376 = vmul.f32 %v373, %v375
      %v377 = vadd.f32 %v373, %v376
      %vm378 = vweird.f32 %v373
      %v379 = vsel %vm378, %v373, %v377
      %s380 = vtos %v379
      %s381 = smul.f32 %s372, %s380
      %s382 = scalar_lea.smem [#allocation10], 0
      %383 = sst [smem:[%s382]] %s381
      %v384 = vld [vmem:[#allocation6] sm:$0x1]
      %v385 = vsel %vm98, %v384, 0.0
      %386 = vadd.xlane.f32.xlu0 %v385
      %v387 = vpop.xlane.xlu0 %386
      %v388 = vrot.slane %v387, 4
      %v389 = vadd.f32 %v387, %v388
      %v390 = vrot.slane %v389, 2
      %v391 = vadd.f32 %v389, %v390
      %v392 = vrot.slane %v391, 1
      %v393 = vadd.f32 %v391, %v392
      %s394 = vtos %v393
      %v395 = vrcp.pop 8.0
      %v396 = vmul.f32 8.0, %v395
      %v397 = vsub.f32 1.0, %v396
      %v398 = vmul.f32 %v395, %v397
      %v399 = vadd.f32 %v395, %v398
      %vm400 = vweird.f32 %v395
      %v401 = vsel %vm400, %v395, %v399
      %s402 = vtos %v401
      %s403 = smul.f32 %s394, %s402
      %s404 = scalar_lea.smem [#allocation10], 1
      %405 = sst [smem:[%s404]] %s403
      %s406 = ssub.f32 0.0, %s360
      %s407 = scalar_lea.smem [#allocation10], 2
      %408 = sst [smem:[%s407]] %s406
    $region25: #{tpu_custom_call.1} parent=1 // pred_fallthru
      _
    // Predicated region
    $region26: #{tpu_custom_call.1} parent=1 // pred_check
      _
    $region27: #{tpu_custom_call.1} parent=1 // pred_check_branch
      %410 = sbr.rel (0) target = $region29
    $region28: #{tpu_custom_call.1} parent=1 // pred_region
      %412 = vsyncadd [#allocation9], 0
      %s414 = sshll.u32 %s3, 4
      %s415 = int_to_ptr.hbm [resolvable:$true] %s414
      %417 = dma.smem_to_hbm [#allocation10], 16, %s415, [#allocation9]
    $region29: #{tpu_custom_call.1} parent=1 // pred_fallthru
      _
    // Predicated region
    $region30: #{tpu_custom_call.1} parent=1 // pred_check
      _
    $region31: #{tpu_custom_call.1} parent=1 // pred_check_branch
      %419 = sbr.rel (0) target = $region33
    $region32: #{tpu_custom_call.1} parent=1 // pred_region
      %421 = dma.done [#allocation9], 16
    $region33: #{tpu_custom_call.1} parent=1 // pred_fallthru
      _
    %422 = sfence
    %423 = vsyncpa [#allocation8], 1
    %424 = vsyncpa [#allocation9], 1

</llo_original>
